<compile_context>
chip_gen: v6e
topology: v6e:2x2x1
jax: 0.10.0
libtpu: 0.0.40
codegen_flags: <defaults>
</compile_context>

<pallas_src>
import math
import functools

import jax
import jax.numpy as jnp
from jax import lax
from jax.experimental import pallas as pl
from jax.experimental.pallas import tpu as pltpu


def mha_kernel(x_ref, wqkvT_ref, bqkv_ref, woT_ref, bo_ref, o_ref, attn_ref,
               *, nhead, head_dim, bb, S, D):
    """One grid step == `bb` batch elements, whole sequence resident in VMEM."""
    # Flatten (bb, S, D) -> (bb*S, D): projections become single big MXU ops.
    x = x_ref[...].reshape(bb * S, D)                       # bf16

    # Fused QKV projection (bf16 inputs, f32 accumulate) + bias.
    qkv = jnp.dot(x, wqkvT_ref[...],
                  preferred_element_type=jnp.float32) + bqkv_ref[...]
    qkv = qkv.astype(jnp.bfloat16)                          # MXU operand dtype

    # Per-batch, per-head attention.  bb and nhead are small & static here, so
    # the Python loops unroll; for large nhead convert to lax.fori_loop or a
    # grid axis to bound live ranges.
    for b in range(bb):
        rows = slice(b * S, (b + 1) * S)
        for h in range(nhead):
            cq = slice(h * head_dim, (h + 1) * head_dim)
            ck = slice(D + h * head_dim, D + (h + 1) * head_dim)
            cv = slice(2 * D + h * head_dim, 2 * D + (h + 1) * head_dim)
            qh = qkv[rows, cq]                              # (S, hd), pre-scaled
            kh = qkv[rows, ck]                              # (S, hd)
            vh = qkv[rows, cv]                              # (S, hd)

            # q @ k^T with contraction on the last dim of both operands: the
            # MXU consumes the "transposed" operand natively (no XLU transpose).
            s = lax.dot_general(qh, kh, (((1,), (1,)), ((), ())),
                                preferred_element_type=jnp.float32)  # (S, S) f32
            s = s - jnp.max(s, axis=-1, keepdims=True)
            p = jnp.exp(s)
            denom = jnp.sum(p, axis=-1, keepdims=True)
            p = p * pl.reciprocal(denom, approx=True)       # EUP, not VALU div

            head_out = jnp.dot(p.astype(jnp.bfloat16), vh,
                               preferred_element_type=jnp.float32)   # (S, hd)
            # Write straight into scratch: no concatenate, bounded live ranges.
            attn_ref[rows, cq] = head_out

    # Output projection: one matmul over all bb*S rows.
    y = jnp.dot(attn_ref[...].astype(jnp.bfloat16), woT_ref[...],
                preferred_element_type=jnp.float32) + bo_ref[...]
    o_ref[...] = y.reshape(bb, S, D).astype(o_ref.dtype)


def multi_head_attention(x, in_proj_weight, in_proj_bias,
                         out_proj_weight, out_proj_bias, nhead, *, block_b=1):
    B, S, D = x.shape
    assert D % nhead == 0 and B % block_b == 0
    head_dim = D // nhead
    scale = 1.0 / math.sqrt(head_dim)

    # Split packed (3D, D) in_proj, fold the softmax scale into Wq / bq,
    # pre-transpose and fuse into a single (D, 3D) weight.  Matmul operands
    # are cast to bf16 (accumulation stays f32 on the MXU); biases stay f32.
    wq = in_proj_weight[0 * D:1 * D] * scale
    wk = in_proj_weight[1 * D:2 * D]
    wv = in_proj_weight[2 * D:3 * D]
    bq = in_proj_bias[0 * D:1 * D] * scale
    bk = in_proj_bias[1 * D:2 * D]
    bv = in_proj_bias[2 * D:3 * D]
    wqkvT = jnp.concatenate([wq.T, wk.T, wv.T], axis=1).astype(jnp.bfloat16)  # (D, 3D)
    bqkv = jnp.concatenate([bq, bk, bv]).reshape(1, 3 * D).astype(jnp.float32)
    woT = out_proj_weight.T.astype(jnp.bfloat16)                              # (D, D)
    bo = out_proj_bias.reshape(1, D).astype(jnp.float32)
    x_bf = x.astype(jnp.bfloat16)

    bb = block_b
    kernel = functools.partial(mha_kernel, nhead=nhead, head_dim=head_dim,
                               bb=bb, S=S, D=D)

    return pl.pallas_call(
        kernel,
        out_shape=jax.ShapeDtypeStruct((B, S, D), x.dtype),
        grid=(B // bb,),
        in_specs=[
            pl.BlockSpec((bb, S, D), lambda i: (i, 0, 0)),   # x
            pl.BlockSpec((D, 3 * D), lambda i: (0, 0)),      # fused Wqkv^T
            pl.BlockSpec((1, 3 * D), lambda i: (0, 0)),      # fused bias
            pl.BlockSpec((D, D), lambda i: (0, 0)),          # Wo^T
            pl.BlockSpec((1, D), lambda i: (0, 0)),          # bo
        ],
        out_specs=pl.BlockSpec((bb, S, D), lambda i: (i, 0, 0)),
        scratch_shapes=[pltpu.VMEM((bb * S, D), jnp.float32)],   # attn heads
        compiler_params=pltpu.CompilerParams(
            dimension_semantics=("parallel",)),
    )(x_bf, wqkvT, bqkv, woT, bo)


def mha_reference(x, in_proj_weight, in_proj_bias,
                  out_proj_weight, out_proj_bias, nhead):
    """Pure-JAX f32 reference matching torch.nn.MultiheadAttention forward."""
    B, S, D = x.shape
    hd = D // nhead
    qkv = jnp.einsum('bsd,ed->bse', x, in_proj_weight) + in_proj_bias
    q, k, v = jnp.split(qkv, 3, axis=-1)
    q = q.reshape(B, S, nhead, hd).transpose(0, 2, 1, 3)
    k = k.reshape(B, S, nhead, hd).transpose(0, 2, 1, 3)
    v = v.reshape(B, S, nhead, hd).transpose(0, 2, 1, 3)
    s = jnp.einsum('bhqd,bhkd->bhqk', q, k) / math.sqrt(hd)
    p = jax.nn.softmax(s, axis=-1)
    o = jnp.einsum('bhqk,bhkd->bhqd', p, v).transpose(0, 2, 1, 3).reshape(B, S, D)
    return jnp.einsum('bsd,ed->bse', o, out_proj_weight) + out_proj_bias


if __name__ == "__main__":
    B, S, D, NHEAD = 2, 8, 32, 4

    key = jax.random.PRNGKey(0)
    kx, kw_in, kb_in, kw_out, kb_out = jax.random.split(key, 5)

    x = jax.random.normal(kx, (B, S, D), dtype=jnp.float32)

    # Deterministic parameter init (shapes match nn.MultiheadAttention).
    bound = 1.0 / math.sqrt(D)
    in_proj_weight = jax.random.uniform(kw_in, (3 * D, D), jnp.float32, -bound, bound)
    in_proj_bias = jax.random.uniform(kb_in, (3 * D,), jnp.float32, -bound, bound)
    out_proj_weight = jax.random.uniform(kw_out, (D, D), jnp.float32, -bound, bound)
    out_proj_bias = jax.random.uniform(kb_out, (D,), jnp.float32, -bound, bound)

    ref = mha_reference(x, in_proj_weight, in_proj_bias,
                        out_proj_weight, out_proj_bias, NHEAD)

    # block_b=1 -> grid=(2,) (keeps a >=2 parallel axis for v7x megacore);
    # block_b=2 -> a single grid step covering both batch elements.
    for bb in (1, 2):
        out = multi_head_attention(x, in_proj_weight, in_proj_bias,
                                   out_proj_weight, out_proj_bias, NHEAD,
                                   block_b=bb)
        out = jax.block_until_ready(out)
        assert out.shape == (B, S, D)
        # bf16 matmuls + approx reciprocal -> looser tolerance vs f32 reference.
        assert jnp.allclose(out, ref, atol=3e-2, rtol=3e-2), f"mismatch (block_b={bb})"

    print("KERNEL_OK")
</pallas_src>

<mosaic_0001>
module attributes {stable_mosaic.version = 11 : i64} {
  func.func @mha_kernel(%arg0: i32, %arg1: memref<1x8x32xbf16, #tpu.memory_space<vmem>>, %arg2: memref<32x96xbf16, #tpu.memory_space<vmem>>, %arg3: memref<1x96xf32, #tpu.memory_space<vmem>>, %arg4: memref<32x32xbf16, #tpu.memory_space<vmem>>, %arg5: memref<1x32xf32, #tpu.memory_space<vmem>>, %arg6: memref<1x8x32xf32, #tpu.memory_space<vmem>>, %arg7: memref<8x32xf32, #tpu.memory_space<vmem>>) attributes {dimension_semantics = [#tpu.dimension_semantics<parallel>], iteration_bounds = array<i64: 2>, scalar_prefetch = 0 : i64, scratch_operands = 1 : i64, tpu.core_type = #tpu.core_type<tc>, window_params = [{transform_indices = @transform_0, window_bounds = array<i64: 1, 8, 32>}, {pipeline_mode = #tpu.pipeline_mode<synchronous>, transform_indices = @transform_1, window_bounds = array<i64: 32, 96>}, {pipeline_mode = #tpu.pipeline_mode<synchronous>, transform_indices = @transform_2, window_bounds = array<i64: 1, 96>}, {pipeline_mode = #tpu.pipeline_mode<synchronous>, transform_indices = @transform_3, window_bounds = array<i64: 32, 32>}, {pipeline_mode = #tpu.pipeline_mode<synchronous>, transform_indices = @transform_4, window_bounds = array<i64: 1, 32>}, {transform_indices = @transform_5, window_bounds = array<i64: 1, 8, 32>}]} {
    %c0 = arith.constant 0 : index
    %c0_0 = arith.constant 0 : index
    %c0_1 = arith.constant 0 : index
    %0 = vector.load %arg1[%c0, %c0_0, %c0_1] : memref<1x8x32xbf16, #tpu.memory_space<vmem>>, vector<1x8x32xbf16>
    %1 = vector.shape_cast %0 : vector<1x8x32xbf16> to vector<8x32xbf16>
    %c0_2 = arith.constant 0 : index
    %c0_3 = arith.constant 0 : index
    %2 = vector.load %arg2[%c0_2, %c0_3] : memref<32x96xbf16, #tpu.memory_space<vmem>>, vector<32x96xbf16>
    %cst = arith.constant dense<0.000000e+00> : vector<8x96xf32>
    %3 = tpu.matmul %1, %2, %cst {dimension_numbers = #tpu.dot_dimension_numbers<[1], [0], [0], [1], [0, 0, 1, 1], [], []>} : vector<8x32xbf16>, vector<32x96xbf16>, vector<8x96xf32> -> vector<8x96xf32>
    %c0_4 = arith.constant 0 : index
    %c0_5 = arith.constant 0 : index
    %4 = vector.load %arg3[%c0_4, %c0_5] : memref<1x96xf32, #tpu.memory_space<vmem>>, vector<1x96xf32>
    %5 = vector.broadcast %4 : vector<1x96xf32> to vector<8x96xf32>
    %6 = arith.addf %3, %5 : vector<8x96xf32>
    %7 = arith.truncf %6 : vector<8x96xf32> to vector<8x96xbf16>
    %8 = vector.extract_strided_slice %7 {offsets = [0, 0], sizes = [8, 8], strides = [1, 1]} : vector<8x96xbf16> to vector<8x8xbf16>
    %9 = vector.extract_strided_slice %7 {offsets = [0, 32], sizes = [8, 8], strides = [1, 1]} : vector<8x96xbf16> to vector<8x8xbf16>
    %10 = vector.extract_strided_slice %7 {offsets = [0, 64], sizes = [8, 8], strides = [1, 1]} : vector<8x96xbf16> to vector<8x8xbf16>
    %cst_6 = arith.constant dense<0.000000e+00> : vector<8x8xf32>
    %11 = tpu.matmul %8, %9, %cst_6 {dimension_numbers = #tpu.dot_dimension_numbers<[1], [1], [0], [0], [0, 0, 1, 0], [], []>} : vector<8x8xbf16>, vector<8x8xbf16>, vector<8x8xf32> -> vector<8x8xf32>
    %cst_7 = arith.constant dense<0xFF800000> : vector<8xf32>
    %12 = vector.multi_reduction <maximumf>, %11, %cst_7 [1] : vector<8x8xf32> to vector<8xf32>
    %13 = vector.shape_cast %12 : vector<8xf32> to vector<8x1xf32>
    %14 = vector.broadcast %13 : vector<8x1xf32> to vector<8x8xf32>
    %15 = arith.subf %11, %14 : vector<8x8xf32>
    %16 = math.exp %15 : vector<8x8xf32>
    %cst_8 = arith.constant dense<0.000000e+00> : vector<8xf32>
    %17 = vector.multi_reduction <add>, %16, %cst_8 [1] : vector<8x8xf32> to vector<8xf32>
    %18 = vector.shape_cast %17 : vector<8xf32> to vector<8x1xf32>
    %19 = tpu.reciprocal %18 {approx = true} : vector<8x1xf32> -> vector<8x1xf32>
    %20 = vector.broadcast %19 : vector<8x1xf32> to vector<8x8xf32>
    %21 = arith.mulf %16, %20 : vector<8x8xf32>
    %22 = arith.truncf %21 : vector<8x8xf32> to vector<8x8xbf16>
    %cst_9 = arith.constant dense<0.000000e+00> : vector<8x8xf32>
    %23 = tpu.matmul %22, %10, %cst_9 {dimension_numbers = #tpu.dot_dimension_numbers<[1], [0], [0], [1], [0, 0, 1, 1], [], []>} : vector<8x8xbf16>, vector<8x8xbf16>, vector<8x8xf32> -> vector<8x8xf32>
    %c0_10 = arith.constant 0 : index
    %c0_11 = arith.constant 0 : index
    %24 = vector.load %arg7[%c0_10, %c0_11] : memref<8x32xf32, #tpu.memory_space<vmem>>, vector<8x8xf32>
    tpu.vector_store %arg7[%c0_10, %c0_11], %23 {strides = array<i32>} : memref<8x32xf32, #tpu.memory_space<vmem>>, vector<8x8xf32>,
    %25 = vector.extract_strided_slice %7 {offsets = [0, 8], sizes = [8, 8], strides = [1, 1]} : vector<8x96xbf16> to vector<8x8xbf16>
    %26 = vector.extract_strided_slice %7 {offsets = [0, 40], sizes = [8, 8], strides = [1, 1]} : vector<8x96xbf16> to vector<8x8xbf16>
    %27 = vector.extract_strided_slice %7 {offsets = [0, 72], sizes = [8, 8], strides = [1, 1]} : vector<8x96xbf16> to vector<8x8xbf16>
    %cst_12 = arith.constant dense<0.000000e+00> : vector<8x8xf32>
    %28 = tpu.matmul %25, %26, %cst_12 {dimension_numbers = #tpu.dot_dimension_numbers<[1], [1], [0], [0], [0, 0, 1, 0], [], []>} : vector<8x8xbf16>, vector<8x8xbf16>, vector<8x8xf32> -> vector<8x8xf32>
    %cst_13 = arith.constant dense<0xFF800000> : vector<8xf32>
    %29 = vector.multi_reduction <maximumf>, %28, %cst_13 [1] : vector<8x8xf32> to vector<8xf32>
    %30 = vector.shape_cast %29 : vector<8xf32> to vector<8x1xf32>
    %31 = vector.broadcast %30 : vector<8x1xf32> to vector<8x8xf32>
    %32 = arith.subf %28, %31 : vector<8x8xf32>
    %33 = math.exp %32 : vector<8x8xf32>
    %cst_14 = arith.constant dense<0.000000e+00> : vector<8xf32>
    %34 = vector.multi_reduction <add>, %33, %cst_14 [1] : vector<8x8xf32> to vector<8xf32>
    %35 = vector.shape_cast %34 : vector<8xf32> to vector<8x1xf32>
    %36 = tpu.reciprocal %35 {approx = true} : vector<8x1xf32> -> vector<8x1xf32>
    %37 = vector.broadcast %36 : vector<8x1xf32> to vector<8x8xf32>
    %38 = arith.mulf %33, %37 : vector<8x8xf32>
    %39 = arith.truncf %38 : vector<8x8xf32> to vector<8x8xbf16>
    %cst_15 = arith.constant dense<0.000000e+00> : vector<8x8xf32>
    %40 = tpu.matmul %39, %27, %cst_15 {dimension_numbers = #tpu.dot_dimension_numbers<[1], [0], [0], [1], [0, 0, 1, 1], [], []>} : vector<8x8xbf16>, vector<8x8xbf16>, vector<8x8xf32> -> vector<8x8xf32>
    %c0_16 = arith.constant 0 : index
    %c8 = arith.constant 8 : index
    %41 = vector.load %arg7[%c0_16, %c8] : memref<8x32xf32, #tpu.memory_space<vmem>>, vector<8x8xf32>
    tpu.vector_store %arg7[%c0_16, %c8], %40 {strides = array<i32>} : memref<8x32xf32, #tpu.memory_space<vmem>>, vector<8x8xf32>,
    %42 = vector.extract_strided_slice %7 {offsets = [0, 16], sizes = [8, 8], strides = [1, 1]} : vector<8x96xbf16> to vector<8x8xbf16>
    %43 = vector.extract_strided_slice %7 {offsets = [0, 48], sizes = [8, 8], strides = [1, 1]} : vector<8x96xbf16> to vector<8x8xbf16>
    %44 = vector.extract_strided_slice %7 {offsets = [0, 80], sizes = [8, 8], strides = [1, 1]} : vector<8x96xbf16> to vector<8x8xbf16>
    %cst_17 = arith.constant dense<0.000000e+00> : vector<8x8xf32>
    %45 = tpu.matmul %42, %43, %cst_17 {dimension_numbers = #tpu.dot_dimension_numbers<[1], [1], [0], [0], [0, 0, 1, 0], [], []>} : vector<8x8xbf16>, vector<8x8xbf16>, vector<8x8xf32> -> vector<8x8xf32>
    %cst_18 = arith.constant dense<0xFF800000> : vector<8xf32>
    %46 = vector.multi_reduction <maximumf>, %45, %cst_18 [1] : vector<8x8xf32> to vector<8xf32>
    %47 = vector.shape_cast %46 : vector<8xf32> to vector<8x1xf32>
    %48 = vector.broadcast %47 : vector<8x1xf32> to vector<8x8xf32>
    %49 = arith.subf %45, %48 : vector<8x8xf32>
    %50 = math.exp %49 : vector<8x8xf32>
    %cst_19 = arith.constant dense<0.000000e+00> : vector<8xf32>
    %51 = vector.multi_reduction <add>, %50, %cst_19 [1] : vector<8x8xf32> to vector<8xf32>
    %52 = vector.shape_cast %51 : vector<8xf32> to vector<8x1xf32>
    %53 = tpu.reciprocal %52 {approx = true} : vector<8x1xf32> -> vector<8x1xf32>
    %54 = vector.broadcast %53 : vector<8x1xf32> to vector<8x8xf32>
    %55 = arith.mulf %50, %54 : vector<8x8xf32>
    %56 = arith.truncf %55 : vector<8x8xf32> to vector<8x8xbf16>
    %cst_20 = arith.constant dense<0.000000e+00> : vector<8x8xf32>
    %57 = tpu.matmul %56, %44, %cst_20 {dimension_numbers = #tpu.dot_dimension_numbers<[1], [0], [0], [1], [0, 0, 1, 1], [], []>} : vector<8x8xbf16>, vector<8x8xbf16>, vector<8x8xf32> -> vector<8x8xf32>
    %c0_21 = arith.constant 0 : index
    %c16 = arith.constant 16 : index
    %58 = vector.load %arg7[%c0_21, %c16] : memref<8x32xf32, #tpu.memory_space<vmem>>, vector<8x8xf32>
    tpu.vector_store %arg7[%c0_21, %c16], %57 {strides = array<i32>} : memref<8x32xf32, #tpu.memory_space<vmem>>, vector<8x8xf32>,
    %59 = vector.extract_strided_slice %7 {offsets = [0, 24], sizes = [8, 8], strides = [1, 1]} : vector<8x96xbf16> to vector<8x8xbf16>
    %60 = vector.extract_strided_slice %7 {offsets = [0, 56], sizes = [8, 8], strides = [1, 1]} : vector<8x96xbf16> to vector<8x8xbf16>
    %61 = vector.extract_strided_slice %7 {offsets = [0, 88], sizes = [8, 8], strides = [1, 1]} : vector<8x96xbf16> to vector<8x8xbf16>
    %cst_22 = arith.constant dense<0.000000e+00> : vector<8x8xf32>
    %62 = tpu.matmul %59, %60, %cst_22 {dimension_numbers = #tpu.dot_dimension_numbers<[1], [1], [0], [0], [0, 0, 1, 0], [], []>} : vector<8x8xbf16>, vector<8x8xbf16>, vector<8x8xf32> -> vector<8x8xf32>
    %cst_23 = arith.constant dense<0xFF800000> : vector<8xf32>
    %63 = vector.multi_reduction <maximumf>, %62, %cst_23 [1] : vector<8x8xf32> to vector<8xf32>
    %64 = vector.shape_cast %63 : vector<8xf32> to vector<8x1xf32>
    %65 = vector.broadcast %64 : vector<8x1xf32> to vector<8x8xf32>
    %66 = arith.subf %62, %65 : vector<8x8xf32>
    %67 = math.exp %66 : vector<8x8xf32>
    %cst_24 = arith.constant dense<0.000000e+00> : vector<8xf32>
    %68 = vector.multi_reduction <add>, %67, %cst_24 [1] : vector<8x8xf32> to vector<8xf32>
    %69 = vector.shape_cast %68 : vector<8xf32> to vector<8x1xf32>
    %70 = tpu.reciprocal %69 {approx = true} : vector<8x1xf32> -> vector<8x1xf32>
    %71 = vector.broadcast %70 : vector<8x1xf32> to vector<8x8xf32>
    %72 = arith.mulf %67, %71 : vector<8x8xf32>
    %73 = arith.truncf %72 : vector<8x8xf32> to vector<8x8xbf16>
    %cst_25 = arith.constant dense<0.000000e+00> : vector<8x8xf32>
    %74 = tpu.matmul %73, %61, %cst_25 {dimension_numbers = #tpu.dot_dimension_numbers<[1], [0], [0], [1], [0, 0, 1, 1], [], []>} : vector<8x8xbf16>, vector<8x8xbf16>, vector<8x8xf32> -> vector<8x8xf32>
    %c0_26 = arith.constant 0 : index
    %c24 = arith.constant 24 : index
    %75 = vector.load %arg7[%c0_26, %c24] : memref<8x32xf32, #tpu.memory_space<vmem>>, vector<8x8xf32>
    tpu.vector_store %arg7[%c0_26, %c24], %74 {strides = array<i32>} : memref<8x32xf32, #tpu.memory_space<vmem>>, vector<8x8xf32>,
    %c0_27 = arith.constant 0 : index
    %c0_28 = arith.constant 0 : index
    %76 = vector.load %arg7[%c0_27, %c0_28] : memref<8x32xf32, #tpu.memory_space<vmem>>, vector<8x32xf32>
    %77 = arith.truncf %76 : vector<8x32xf32> to vector<8x32xbf16>
    %c0_29 = arith.constant 0 : index
    %c0_30 = arith.constant 0 : index
    %78 = vector.load %arg4[%c0_29, %c0_30] : memref<32x32xbf16, #tpu.memory_space<vmem>>, vector<32x32xbf16>
    %cst_31 = arith.constant dense<0.000000e+00> : vector<8x32xf32>
    %79 = tpu.matmul %77, %78, %cst_31 {dimension_numbers = #tpu.dot_dimension_numbers<[1], [0], [0], [1], [0, 0, 1, 1], [], []>} : vector<8x32xbf16>, vector<32x32xbf16>, vector<8x32xf32> -> vector<8x32xf32>
    %c0_32 = arith.constant 0 : index
    %c0_33 = arith.constant 0 : index
    %80 = vector.load %arg5[%c0_32, %c0_33] : memref<1x32xf32, #tpu.memory_space<vmem>>, vector<1x32xf32>
    %81 = vector.broadcast %80 : vector<1x32xf32> to vector<8x32xf32>
    %82 = arith.addf %79, %81 : vector<8x32xf32>
    %83 = vector.shape_cast %82 : vector<8x32xf32> to vector<1x8x32xf32>
    %c0_34 = arith.constant 0 : index
    %c0_35 = arith.constant 0 : index
    %c0_36 = arith.constant 0 : index
    %84 = vector.load %arg6[%c0_34, %c0_35, %c0_36] : memref<1x8x32xf32, #tpu.memory_space<vmem>>, vector<1x8x32xf32>
    tpu.vector_store %arg6[%c0_34, %c0_35, %c0_36], %83 {strides = array<i32>} : memref<1x8x32xf32, #tpu.memory_space<vmem>>, vector<1x8x32xf32>,
    return
  }
  func.func @transform_0(%arg0: i32) -> (i32, i32, i32) {
    %c0_i32 = arith.constant 0 : i32
    %c0_i32_0 = arith.constant 0 : i32
    %c0_i32_1 = arith.constant 0 : i32
    return %arg0, %c0_i32, %c0_i32_0 : i32, i32, i32
  }
  func.func @transform_1(%arg0: i32) -> (i32, i32) {
    %c0_i32 = arith.constant 0 : i32
    %c0_i32_0 = arith.constant 0 : i32
    %c0_i32_1 = arith.constant 0 : i32
    return %c0_i32, %c0_i32_0 : i32, i32
  }
  func.func @transform_2(%arg0: i32) -> (i32, i32) {
    %c0_i32 = arith.constant 0 : i32
    %c0_i32_0 = arith.constant 0 : i32
    %c0_i32_1 = arith.constant 0 : i32
    return %c0_i32, %c0_i32_0 : i32, i32
  }
  func.func @transform_3(%arg0: i32) -> (i32, i32) {
    %c0_i32 = arith.constant 0 : i32
    %c0_i32_0 = arith.constant 0 : i32
    %c0_i32_1 = arith.constant 0 : i32
    return %c0_i32, %c0_i32_0 : i32, i32
  }
  func.func @transform_4(%arg0: i32) -> (i32, i32) {
    %c0_i32 = arith.constant 0 : i32
    %c0_i32_0 = arith.constant 0 : i32
    %c0_i32_1 = arith.constant 0 : i32
    return %c0_i32, %c0_i32_0 : i32, i32
  }
  func.func @transform_5(%arg0: i32) -> (i32, i32, i32) {
    %c0_i32 = arith.constant 0 : i32
    %c0_i32_0 = arith.constant 0 : i32
    %c0_i32_1 = arith.constant 0 : i32
    return %arg0, %c0_i32, %c0_i32_0 : i32, i32, i32
  }
}

</mosaic_0001>

<llo_original>
// kernel: tpu_custom_call.1
$region0: #{tpu_custom_call.1}
  #allocation0 [shape = 'u32[]', space=smem, size = 0x4, offset = 0x4, fixed_abs, tag = 'smem constant byte address 0x4 - core index']
  #allocation1 [shape = 'u32[144,128]{1,0:T(1,128)}', space=vmem, size = 0x12000, scoped, tag = 'internal scratch']
  #allocation2 [shape = 'f32[8,32]{1,0:T(8,128)}', space=vmem, size = 0x1000, scoped, tag = 'scratch operand']
  %s0 = inlined_call_operand.hbm [shape: bf16[2,8,32], index: 0, kind: input, shape index: {}]
  %s1 = inlined_call_operand.hbm [shape: bf16[32,96], index: 1, kind: input, shape index: {}]
  %s2 = inlined_call_operand.vmem [shape: f32[1,96], index: 2, kind: input, shape index: {}]
  %s3 = inlined_call_operand.hbm [shape: bf16[32,32], index: 3, kind: input, shape index: {}]
  %s4 = inlined_call_operand.vmem [shape: f32[1,32], index: 4, kind: input, shape index: {}]
  %s5 = inlined_call_operand.hbm [shape: f32[2,8,32], index: 5, kind: output, shape index: {}]
  %s6 = sld [smem:[#allocation0]]
  $region65: #{tpu_custom_call.1} parent=0
    _
  %s8 = ssub.s32 1, %s6
  %s9 = scalar_select 0, %s8, %s6
  $region1: #{tpu_custom_call.1} parent=0
    #allocation3 [shape = 'u8[4096]{0}', space=vmem, size = 0x1000, scoped, tag = 'input window, operand 0']
    #allocation4 [shape = 's32[2]{0}', space=sflag, size = 0x8, scoped, tag = 'scoped memory for tpu_custom_call.1']
    #allocation5 [shape = 's32[2]{0}', space=sflag, size = 0x8, scoped, tag = 'scoped memory for tpu_custom_call.1']
    #allocation6 [shape = 'u8[8192]{0}', space=vmem, size = 0x2000, scoped, tag = 'input window, operand 1, single buffered']
    #allocation7 [shape = 's32[1]{0}', space=sflag, size = 0x4, scoped, tag = 'scoped memory for tpu_custom_call.1']
    #allocation8 [shape = 'u8[8192]{0}', space=vmem, size = 0x2000, scoped, tag = 'input window, operand 3, single buffered']
    #allocation9 [shape = 'u8[8192]{0}', space=vmem, size = 0x2000, scoped, tag = 'output window, operand 0']
    %10 = vsyncpa [#allocation4], 0
    %s11 = scalar_lea.sflag [#allocation4], 1
    %12 = vsyncpa %s11, 0
    %13 = vsyncpa [#allocation7], 0
    %14 = vsyncpa [#allocation5], 0
    %s15 = scalar_lea.sflag [#allocation5], 1
    %16 = vsyncpa %s15, 0
    loop: start=0, step=1, limit=4
    $region2: #{tpu_custom_call.1} parent=1 // loop_pre_header
      _
    $region3: #{tpu_custom_call.1} parent=1 // loop_header
      %s18 = sphi 0, %s22
      %p19 = scmp.ge.s32.totalorder %s18, 4
      %s28 = sphi 0, %s30
      %s31 = sphi 0, %s28
      %s32 = sphi 0, %s31
      %s48 = sphi 0, %s32
      %s52 = sphi 0, %s52
      %s54 = sphi 0, %s52
      %s55 = sphi 0, %s54
      %s69 = sphi 0, %s55
      %s73 = sphi 0, %s73
      %s75 = sphi 0, %s73
      %s76 = sphi 0, %s75
      %s90 = sphi 0, %s76
      %s94 = sphi 0, %s94
      %s96 = sphi 0, %s94
      %s97 = sphi 0, %s96
      %s111 = sphi 0, %s97
      %s115 = sphi 0, %s115
      %s117 = sphi 0, %s115
      %s118 = sphi 0, %s117
      %s132 = sphi 0, %s118
      %s138 = sphi 0, %s140
      %s141 = sphi 0, %s138
      %s142 = sphi 0, %s141
      %s158 = sphi 0, %s142
    $region4: #{tpu_custom_call.1} parent=1 // loop_header_branch
      %21 = sbr.rel (%p19) target = $region8
    $region5: #{tpu_custom_call.1} parent=1 // loop_body
      %s23 = ssub.s32 %s18, 1
      %s24 = ssub.s32 %s18, 2
      %s25 = sadd.s32 %s18, 1
      %s26 = ssub.s32 %s18, %s25
      %p27 = scmp.eq.s32.totalorder %s26, 0
      %s29 = sadd.s32 %s28, 1
      %s30 = scalar_select %p27, %s28, %s29
      %p33 = pneg %p27
      %p34 = scmp.eq.s32.totalorder %s18, 1
      %p35 = por %p33, %p34
      %p36 = scmp.ne.s32.totalorder %s28, %s31
      %p37 = scmp.eq.s32.totalorder %s18, 0
      %p38 = por %p36, %p37
      %p39 = scmp.ne.s32.totalorder %s28, %s31
      %p40 = scmp.eq.s32.totalorder %s23, 1
      %p41 = por %p39, %p40
      %p42 = scmp.ne.s32.totalorder %s31, %s32
      %p43 = scmp.eq.s32.totalorder %s23, 0
      %p44 = por %p42, %p43
      %p45 = scmp.ne.s32.totalorder %s31, %s32
      %p46 = scmp.eq.s32.totalorder %s24, 1
      %p47 = por %p45, %p46
      %p49 = scmp.ne.s32.totalorder %s32, %s48
      %p50 = scmp.eq.s32.totalorder %s24, 0
      %p51 = por %p49, %p50
      %s53 = sadd.s32 %s52, 1
      %p56 = scmp.eq.s32.totalorder %s18, 1
      %p57 = scmp.ne.s32.totalorder %s52, %s54
      %p58 = scmp.eq.s32.totalorder %s18, 0
      %p59 = por %p57, %p58
      %p60 = scmp.ne.s32.totalorder %s52, %s54
      %p61 = scmp.eq.s32.totalorder %s23, 1
      %p62 = por %p60, %p61
      %p63 = scmp.ne.s32.totalorder %s54, %s55
      %p64 = scmp.eq.s32.totalorder %s23, 0
      %p65 = por %p63, %p64
      %p66 = scmp.ne.s32.totalorder %s54, %s55
      %p67 = scmp.eq.s32.totalorder %s24, 1
      %p68 = por %p66, %p67
      %p70 = scmp.ne.s32.totalorder %s55, %s69
      %p71 = scmp.eq.s32.totalorder %s24, 0
      %p72 = por %p70, %p71
      %s74 = sadd.s32 %s73, 1
      %p77 = scmp.eq.s32.totalorder %s18, 1
      %p78 = scmp.ne.s32.totalorder %s73, %s75
      %p79 = scmp.eq.s32.totalorder %s18, 0
      %p80 = por %p78, %p79
      %p81 = scmp.ne.s32.totalorder %s73, %s75
      %p82 = scmp.eq.s32.totalorder %s23, 1
      %p83 = por %p81, %p82
      %p84 = scmp.ne.s32.totalorder %s75, %s76
      %p85 = scmp.eq.s32.totalorder %s23, 0
      %p86 = por %p84, %p85
      %p87 = scmp.ne.s32.totalorder %s75, %s76
      %p88 = scmp.eq.s32.totalorder %s24, 1
      %p89 = por %p87, %p88
      %p91 = scmp.ne.s32.totalorder %s76, %s90
      %p92 = scmp.eq.s32.totalorder %s24, 0
      %p93 = por %p91, %p92
      %s95 = sadd.s32 %s94, 1
      %p98 = scmp.eq.s32.totalorder %s18, 1
      %p99 = scmp.ne.s32.totalorder %s94, %s96
      %p100 = scmp.eq.s32.totalorder %s18, 0
      %p101 = por %p99, %p100
      %p102 = scmp.ne.s32.totalorder %s94, %s96
      %p103 = scmp.eq.s32.totalorder %s23, 1
      %p104 = por %p102, %p103
      %p105 = scmp.ne.s32.totalorder %s96, %s97
      %p106 = scmp.eq.s32.totalorder %s23, 0
      %p107 = por %p105, %p106
      %p108 = scmp.ne.s32.totalorder %s96, %s97
      %p109 = scmp.eq.s32.totalorder %s24, 1
      %p110 = por %p108, %p109
      %p112 = scmp.ne.s32.totalorder %s97, %s111
      %p113 = scmp.eq.s32.totalorder %s24, 0
      %p114 = por %p112, %p113
      %s116 = sadd.s32 %s115, 1
      %p119 = scmp.eq.s32.totalorder %s18, 1
      %p120 = scmp.ne.s32.totalorder %s115, %s117
      %p121 = scmp.eq.s32.totalorder %s18, 0
      %p122 = por %p120, %p121
      %p123 = scmp.ne.s32.totalorder %s115, %s117
      %p124 = scmp.eq.s32.totalorder %s23, 1
      %p125 = por %p123, %p124
      %p126 = scmp.ne.s32.totalorder %s117, %s118
      %p127 = scmp.eq.s32.totalorder %s23, 0
      %p128 = por %p126, %p127
      %p129 = scmp.ne.s32.totalorder %s117, %s118
      %p130 = scmp.eq.s32.totalorder %s24, 1
      %p131 = por %p129, %p130
      %p133 = scmp.ne.s32.totalorder %s118, %s132
      %p134 = scmp.eq.s32.totalorder %s24, 0
      %p135 = por %p133, %p134
      %s136 = ssub.s32 %s18, %s25
      %p137 = scmp.eq.s32.totalorder %s136, 0
      %s139 = sadd.s32 %s138, 1
      %s140 = scalar_select %p137, %s138, %s139
      %p143 = pneg %p137
      %p144 = scmp.eq.s32.totalorder %s18, 1
      %p145 = por %p143, %p144
      %p146 = scmp.ne.s32.totalorder %s138, %s141
      %p147 = scmp.eq.s32.totalorder %s18, 0
      %p148 = por %p146, %p147
      %p149 = scmp.ne.s32.totalorder %s138, %s141
      %p150 = scmp.eq.s32.totalorder %s23, 1
      %p151 = por %p149, %p150
      %p152 = scmp.ne.s32.totalorder %s141, %s142
      %p153 = scmp.eq.s32.totalorder %s23, 0
      %p154 = por %p152, %p153
      %p155 = scmp.ne.s32.totalorder %s141, %s142
      %p156 = scmp.eq.s32.totalorder %s24, 1
      %p157 = por %p155, %p156
      %p159 = scmp.ne.s32.totalorder %s142, %s158
      %p160 = scmp.eq.s32.totalorder %s24, 0
      %p161 = por %p159, %p160
      %p162 = scmp.le.s32.totalorder 1, %s18
      %p163 = scmp.lt.s32.totalorder %s18, 3
      %p164 = pnand %p162, %p163
      %p165 = pneg %p164
      // Predicated region
      $region9: #{tpu_custom_call.1} parent=5 // pred_check
        _
      $region10: #{tpu_custom_call.1} parent=5 // pred_check_branch
        %167 = sbr.rel (%p164) target = $region12
      $region11: #{tpu_custom_call.1} parent=5 // pred_region
        %s168 = ssub.s32 %s18, 1
        // Predicated region
        $region13: #{tpu_custom_call.1} parent=11 // pred_check
          %p169 = pneg %p65
        $region14: #{tpu_custom_call.1} parent=11 // pred_check_branch
          %171 = sbr.rel (%p169) target = $region16
        $region15: #{tpu_custom_call.1} parent=11 // pred_region
          %s173 = ssub.s32 256, 256
          %174 = vsyncadd [#allocation7], %s173
          %s175 = sshll.u32 [#allocation6], 4
          %s176 = int_to_ptr.vmem [resolvable:$true] %s175
          %181 = dma.hbm_to_vmem [thread:$0]  %s1, 256, %s176, [#allocation7], 64, 64, 4
        $region16: #{tpu_custom_call.1} parent=11 // pred_fallthru
          _
        // Predicated region
        $region17: #{tpu_custom_call.1} parent=11 // pred_check
          %p182 = pneg %p86
        $region18: #{tpu_custom_call.1} parent=11 // pred_check_branch
          %184 = sbr.rel (%p182) target = $region20
        $region19: #{tpu_custom_call.1} parent=11 // pred_region
          _
        $region20: #{tpu_custom_call.1} parent=11 // pred_fallthru
          _
        // Predicated region
        $region21: #{tpu_custom_call.1} parent=11 // pred_check
          %p185 = pneg %p107
        $region22: #{tpu_custom_call.1} parent=11 // pred_check_branch
          %187 = sbr.rel (%p185) target = $region24
        $region23: #{tpu_custom_call.1} parent=11 // pred_region
          %s189 = ssub.s32 256, 256
          %190 = vsyncadd [#allocation7], %s189
          %s191 = sshll.u32 [#allocation8], 4
          %s192 = int_to_ptr.vmem [resolvable:$true] %s191
          %197 = dma.hbm_to_vmem [thread:$0]  %s3, 256, %s192, [#allocation7], 64, 64, 4
        $region24: #{tpu_custom_call.1} parent=11 // pred_fallthru
          _
        // Predicated region
        $region25: #{tpu_custom_call.1} parent=11 // pred_check
          %p198 = pneg %p128
        $region26: #{tpu_custom_call.1} parent=11 // pred_check_branch
          %200 = sbr.rel (%p198) target = $region28
        $region27: #{tpu_custom_call.1} parent=11 // pred_region
          _
        $region28: #{tpu_custom_call.1} parent=11 // pred_fallthru
          _
      $region12: #{tpu_custom_call.1} parent=5 // pred_fallthru
        _
      %p201 = scmp.lt.s32.totalorder %s18, 2
      // Predicated region
      $region29: #{tpu_custom_call.1} parent=5 // pred_check
        %p202 = pneg %p201
      $region30: #{tpu_custom_call.1} parent=5 // pred_check_branch
        %204 = sbr.rel (%p202) target = $region32
      $region31: #{tpu_custom_call.1} parent=5 // pred_region
        // Predicated region
        $region33: #{tpu_custom_call.1} parent=31 // pred_check
          %p205 = pneg %p38
        $region34: #{tpu_custom_call.1} parent=31 // pred_check_branch
          %207 = sbr.rel (%p205) target = $region36
        $region35: #{tpu_custom_call.1} parent=31 // pred_region
          %s208 = sand.u32 %s28, 1
          %s209 = scalar_lea.sflag [#allocation4], %s208
          %s210 = sand.u32 %s28, 1
          %s211 = smul.addr %s210, 4
          %s212 = scalar_lea.vmem [#allocation3], %s211
          %s214 = ssub.s32 64, 64
          %215 = vsyncadd %s209, %s214
          %s216 = smul.addr %s18, 64
          %s217 = scalar_lea.hbm %s0, %s216
          %s219 = sshll.u32 %s212, 4
          %s220 = int_to_ptr.vmem [resolvable:$true] %s219
          %222 = dma.hbm_to_vmem [thread:$0]  %s217, 64, %s220, %s209
        $region36: #{tpu_custom_call.1} parent=31 // pred_fallthru
          _
      $region32: #{tpu_custom_call.1} parent=5 // pred_fallthru
        _
      %p223 = scmp.le.s32.totalorder 1, %s18
      %p224 = scmp.lt.s32.totalorder %s18, 3
      %p225 = pnand %p223, %p224
      %p226 = pneg %p225
      // Predicated region
      $region37: #{tpu_custom_call.1} parent=5 // pred_check
        _
      $region38: #{tpu_custom_call.1} parent=5 // pred_check_branch
        %228 = sbr.rel (%p225) target = $region40
      $region39: #{tpu_custom_call.1} parent=5 // pred_region
        %s229 = ssub.s32 %s18, 1
        %s230 = sand.u32 %s31, 1
        %s231 = scalar_lea.sflag [#allocation4], %s230
        %s232 = sand.u32 %s31, 1
        %s233 = smul.addr %s232, 4
        %s234 = scalar_lea.vmem [#allocation3], %s233
        // Predicated region
        $region41: #{tpu_custom_call.1} parent=39 // pred_check
          %p235 = pneg %p44
        $region42: #{tpu_custom_call.1} parent=39 // pred_check_branch
          %237 = sbr.rel (%p235) target = $region44
        $region43: #{tpu_custom_call.1} parent=39 // pred_region
          %238 = dma.done %s231, 64
        $region44: #{tpu_custom_call.1} parent=39 // pred_fallthru
          _
        // Predicated region
        $region45: #{tpu_custom_call.1} parent=39 // pred_check
          %p239 = pneg %p65
        $region46: #{tpu_custom_call.1} parent=39 // pred_check_branch
          %241 = sbr.rel (%p239) target = $region48
        $region47: #{tpu_custom_call.1} parent=39 // pred_region
          %242 = dma.done [#allocation7], 256
        $region48: #{tpu_custom_call.1} parent=39 // pred_fallthru
          _
        // Predicated region
        $region49: #{tpu_custom_call.1} parent=39 // pred_check
          %p243 = pneg %p107
        $region50: #{tpu_custom_call.1} parent=39 // pred_check_branch
          %245 = sbr.rel (%p243) target = $region52
        $region51: #{tpu_custom_call.1} parent=39 // pred_region
          %246 = dma.done [#allocation7], 256
        $region52: #{tpu_custom_call.1} parent=39 // pred_fallthru
          _
        %s247 = sand.u32 %s31, 1
        %s248 = scalar_lea.sflag [#allocation4], %s247
        %s249 = sand.u32 %s31, 1
        %s250 = smul.addr %s249, 4
        %s251 = scalar_lea.vmem [#allocation3], %s250
        %p252 = pneg %p44
        %p253 = pneg %p41
        %p254 = pneg %p65
        %p255 = pneg %p62
        %p256 = pneg %p86
        %p257 = pneg %p83
        %p258 = pneg %p107
        %p259 = pneg %p104
        %p260 = pneg %p128
        %p261 = pneg %p125
        %p262 = pneg %p154
        %p263 = pneg %p151
        %s264 = sand.u32 %s141, 1
        %s265 = scalar_lea.sflag [#allocation5], %s264
        %s266 = sand.u32 %s141, 1
        %s267 = smul.addr %s266, 8
        %s268 = scalar_lea.vmem [#allocation9], %s267
        %v270 = vld [vmem:[%s234] sm:$0xf]
        %v271 = vld [vmem:[#allocation6] sm:$0xf]
        %v272 = vld [vmem:[#allocation6 + $0x4] sm:$0xf]
        %v273 = vld [vmem:[#allocation6 + $0x8] sm:$0xf]
        %v274 = vld [vmem:[#allocation6 + $0xc] sm:$0xf]
        %v275 = vld [vmem:[%s2] sm:$0x1]
        %v277 = vlaneseq
        %v278 = vshrl.u32 %v277, 7
        %v279 = vsub.s32 0, %v278
        %v280 = vrot.slane %v275, %v279
        %v286 = vunpack.c.l.b16 %v271
        %v287 = vunpack.c.l.b16 %v272
        %v288 = vunpack.c.l.b16 %v273
        %v289 = vunpack.c.l.b16 %v274
        %v290 = vpack.c.b16 %v287, %v286
        %v291 = vpack.c.b16 %v289, %v288
        %vm294 = vcmask 261120
        %v296 = vsel %vm294, %v270, 0
        %298 = vmatprep.subr.bf16.mxu0 0
        %299 = vmatpush1.bf16.msra.mxu0 0
        %300 = vmatprep.subr.bf16.mxu0 0
        %301 = vmatpush1.bf16.msra.mxu0 0
        %302 = vmatprep.subr.bf16.mxu0 0
        %303 = vmatpush1.bf16.msra.mxu0 0
        %304 = vmatprep.subr.bf16.mxu0 0
        %305 = vmatpush1.bf16.msra.mxu0 0
        %306 = vmatprep.subr.bf16.mxu0 0
        %307 = vmatpush1.bf16.msra.mxu0 0
        %308 = vmatprep.subr.bf16.mxu0 0
        %309 = vmatpush1.bf16.msra.mxu0 0
        %310 = vmatprep.subr.bf16.mxu0 0
        %311 = vmatpush1.bf16.msra.mxu0 %v291
        %312 = vmatprep.subr.bf16.mxu0 0
        %313 = vmatpush1.bf16.msra.mxu0 %v290
        %314 = vmatprep.subr.bf16.mxu0 0
        %315 = vmatpush2.bf16.msra.mxu0 0
        %316 = vmatprep.subr.bf16.mxu0 0
        %317 = vmatpush2.bf16.msra.mxu0 0
        %318 = vmatprep.subr.bf16.mxu0 0
        %319 = vmatpush2.bf16.msra.mxu0 0
        %320 = vmatprep.subr.bf16.mxu0 0
        %321 = vmatpush2.bf16.msra.mxu0 0
        %322 = vmatprep.subr.bf16.mxu0 0
        %323 = vmatpush2.bf16.msra.mxu0 0
        %324 = vmatprep.subr.bf16.mxu0 0
        %325 = vmatpush2.bf16.msra.mxu0 0
        %326 = vmatprep.subr.bf16.mxu0 0
        %327 = vmatpush2.bf16.msra.mxu0 0
        %328 = vmatprep.subr.bf16.mxu0 0
        %329 = vmatpush2.bf16.msra.mxu0 0
        %330 = vmatprep.mubr.bf16.mxu0 0
        %331 = vmatmul.mubr.bf16.gmra.mxu0 %v296
        %v332 = vpop.f32.mrf.mxu0
        %v333 = vadd.f32 %v280, %v332
        %v334 = vpop.f32.mrf.mxu0
        %v335 = vpop.f32.mrf.mxu0
        %v336 = vpop.f32.mrf.mxu0
        %337 = vdwg.mxu0
        %v338 = vpack.c.bf16 %v333, %v333
        %340 = vrot.lane.b32.xlu0 %v338, 96
        %v341 = vpop.permute.xlu0 %340
        %vm342 = vcmask 64512
        %v344 = vsel %vm342, %v338, 0
        %v347 = vsel %vm342, %v341, 0
        %349 = vmatprep.subr.bf16.mxu0 0
        %350 = vmatpush1.bf16.xpose.msra.mxu0 0
        %351 = vmatprep.subr.bf16.mxu0 0
        %352 = vmatpush1.bf16.xpose.msra.mxu0 0
        %353 = vmatprep.subr.bf16.mxu0 0
        %354 = vmatpush1.bf16.xpose.msra.mxu0 0
        %355 = vmatprep.subr.bf16.mxu0 0
        %356 = vmatpush1.bf16.xpose.msra.mxu0 0
        %357 = vmatprep.subr.bf16.mxu0 0
        %358 = vmatpush1.bf16.xpose.msra.mxu0 0
        %359 = vmatprep.subr.bf16.mxu0 0
        %360 = vmatpush1.bf16.xpose.msra.mxu0 0
        %361 = vmatprep.subr.bf16.mxu0 0
        %362 = vmatpush1.bf16.xpose.msra.mxu0 0
        %363 = vmatprep.subr.bf16.mxu0 0
        %364 = vmatpush1.bf16.xpose.msra.mxu0 %v347
        %365 = vmatprep.subr.bf16.mxu0 0
        %366 = vmatpush2.bf16.xpose.msra.mxu0 0
        %367 = vmatprep.subr.bf16.mxu0 0
        %368 = vmatpush2.bf16.xpose.msra.mxu0 0
        %369 = vmatprep.subr.bf16.mxu0 0
        %370 = vmatpush2.bf16.xpose.msra.mxu0 0
        %371 = vmatprep.subr.bf16.mxu0 0
        %372 = vmatpush2.bf16.xpose.msra.mxu0 0
        %373 = vmatprep.subr.bf16.mxu0 0
        %374 = vmatpush2.bf16.xpose.msra.mxu0 0
        %375 = vmatprep.subr.bf16.mxu0 0
        %376 = vmatpush2.bf16.xpose.msra.mxu0 0
        %377 = vmatprep.subr.bf16.mxu0 0
        %378 = vmatpush2.bf16.xpose.msra.mxu0 0
        %379 = vmatprep.subr.bf16.mxu0 0
        %380 = vmatpush2.bf16.xpose.msra.mxu0 0
        %381 = vmatprep.mubr.bf16.mxu0 0
        %382 = vmatmul.mubr.bf16.gmra.mxu0 %v344
        %v383 = vpop.f32.mrf.mxu0
        %v384 = vadd.f32 0.0, %v383
        %v385 = vpop.f32.mrf.mxu0
        %v386 = vpop.f32.mrf.mxu0
        %v387 = vpop.f32.mrf.mxu0
        %388 = vdwg.mxu0
        %v389 = vsel %vm342, %v384, -inf
        %390 = vmax.xlane.f32.xlu0 %v389
        %v391 = vpop.xlane.xlu0 %390
        %v392 = vsub.f32 %v384, %v391
        %v393 = vmul.f32 %v392, 1.442695
        %v394 = vpow.pop %v393
        %v395 = vsel %vm342, %v394, 0.0
        %396 = vadd.xlane.f32.xlu0 %v395
        %v397 = vpop.xlane.xlu0 %396
        %v398 = vrcp.pop %v397
        %v399 = vmul.f32 %v394, %v398
        %v400 = vpack.c.bf16 %v399, %v399
        %401 = vrot.lane.b32.xlu0 %v338, 64
        %v402 = vpop.permute.xlu0 %401
        %v404 = vsel %vm342, %v400, 0
        %vm406 = vcmask 1043456
        %v408 = vsel %vm406, %v402, 0
        %410 = vmatprep.subr.bf16.mxu0 0
        %411 = vmatpush1.bf16.msra.mxu0 0
        %412 = vmatprep.subr.bf16.mxu0 0
        %413 = vmatpush1.bf16.msra.mxu0 0
        %414 = vmatprep.subr.bf16.mxu0 0
        %415 = vmatpush1.bf16.msra.mxu0 0
        %416 = vmatprep.subr.bf16.mxu0 0
        %417 = vmatpush1.bf16.msra.mxu0 0
        %418 = vmatprep.subr.bf16.mxu0 0
        %419 = vmatpush1.bf16.msra.mxu0 0
        %420 = vmatprep.subr.bf16.mxu0 0
        %421 = vmatpush1.bf16.msra.mxu0 0
        %422 = vmatprep.subr.bf16.mxu0 0
        %423 = vmatpush1.bf16.msra.mxu0 0
        %424 = vmatprep.subr.bf16.mxu0 0
        %425 = vmatpush1.bf16.msra.mxu0 %v408
        %426 = vmatprep.subr.bf16.mxu0 0
        %427 = vmatpush2.bf16.msra.mxu0 0
        %428 = vmatprep.subr.bf16.mxu0 0
        %429 = vmatpush2.bf16.msra.mxu0 0
        %430 = vmatprep.subr.bf16.mxu0 0
        %431 = vmatpush2.bf16.msra.mxu0 0
        %432 = vmatprep.subr.bf16.mxu0 0
        %433 = vmatpush2.bf16.msra.mxu0 0
        %434 = vmatprep.subr.bf16.mxu0 0
        %435 = vmatpush2.bf16.msra.mxu0 0
        %436 = vmatprep.subr.bf16.mxu0 0
        %437 = vmatpush2.bf16.msra.mxu0 0
        %438 = vmatprep.subr.bf16.mxu0 0
        %439 = vmatpush2.bf16.msra.mxu0 0
        %440 = vmatprep.subr.bf16.mxu0 0
        %441 = vmatpush2.bf16.msra.mxu0 0
        %442 = vmatprep.mubr.bf16.mxu0 0
        %443 = vmatmul.mubr.bf16.gmra.mxu0 %v404
        %v444 = vpop.f32.mrf.mxu0
        %v445 = vadd.f32 0.0, %v444
        %v446 = vpop.f32.mrf.mxu0
        %v447 = vpop.f32.mrf.mxu0
        %v448 = vpop.f32.mrf.mxu0
        %449 = vdwg.mxu0
        %450 = vst.msk [vmem:[#allocation2] sm:$0xff] %vm342, %v445
        %451 = vrot.lane.b32.xlu0 %v338, 120
        %v452 = vpop.permute.xlu0 %451
        %453 = vrot.lane.b32.xlu0 %v338, 88
        %v454 = vpop.permute.xlu0 %453
        %v456 = vsel %vm342, %v452, 0
        %v459 = vsel %vm342, %v454, 0
        %461 = vmatprep.subr.bf16.mxu0 0
        %462 = vmatpush1.bf16.xpose.msra.mxu0 0
        %463 = vmatprep.subr.bf16.mxu0 0
        %464 = vmatpush1.bf16.xpose.msra.mxu0 0
        %465 = vmatprep.subr.bf16.mxu0 0
        %466 = vmatpush1.bf16.xpose.msra.mxu0 0
        %467 = vmatprep.subr.bf16.mxu0 0
        %468 = vmatpush1.bf16.xpose.msra.mxu0 0
        %469 = vmatprep.subr.bf16.mxu0 0
        %470 = vmatpush1.bf16.xpose.msra.mxu0 0
        %471 = vmatprep.subr.bf16.mxu0 0
        %472 = vmatpush1.bf16.xpose.msra.mxu0 0
        %473 = vmatprep.subr.bf16.mxu0 0
        %474 = vmatpush1.bf16.xpose.msra.mxu0 0
        %475 = vmatprep.subr.bf16.mxu0 0
        %476 = vmatpush1.bf16.xpose.msra.mxu0 %v459
        %477 = vmatprep.subr.bf16.mxu0 0
        %478 = vmatpush2.bf16.xpose.msra.mxu0 0
        %479 = vmatprep.subr.bf16.mxu0 0
        %480 = vmatpush2.bf16.xpose.msra.mxu0 0
        %481 = vmatprep.subr.bf16.mxu0 0
        %482 = vmatpush2.bf16.xpose.msra.mxu0 0
        %483 = vmatprep.subr.bf16.mxu0 0
        %484 = vmatpush2.bf16.xpose.msra.mxu0 0
        %485 = vmatprep.subr.bf16.mxu0 0
        %486 = vmatpush2.bf16.xpose.msra.mxu0 0
        %487 = vmatprep.subr.bf16.mxu0 0
        %488 = vmatpush2.bf16.xpose.msra.mxu0 0
        %489 = vmatprep.subr.bf16.mxu0 0
        %490 = vmatpush2.bf16.xpose.msra.mxu0 0
        %491 = vmatprep.subr.bf16.mxu0 0
        %492 = vmatpush2.bf16.xpose.msra.mxu0 0
        %493 = vmatprep.mubr.bf16.mxu0 0
        %494 = vmatmul.mubr.bf16.gmra.mxu0 %v456
        %v495 = vpop.f32.mrf.mxu0
        %v496 = vadd.f32 0.0, %v495
        %v497 = vpop.f32.mrf.mxu0
        %v498 = vpop.f32.mrf.mxu0
        %v499 = vpop.f32.mrf.mxu0
        %500 = vdwg.mxu0
        %v501 = vsel %vm342, %v496, -inf
        %502 = vmax.xlane.f32.xlu0 %v501
        %v503 = vpop.xlane.xlu0 %502
        %v504 = vsub.f32 %v496, %v503
        %v505 = vmul.f32 %v504, 1.442695
        %v506 = vpow.pop %v505
        %v507 = vsel %vm342, %v506, 0.0
        %508 = vadd.xlane.f32.xlu0 %v507
        %v509 = vpop.xlane.xlu0 %508
        %v510 = vrcp.pop %v509
        %v511 = vmul.f32 %v506, %v510
        %v512 = vpack.c.bf16 %v511, %v511
        %513 = vrot.lane.b32.xlu0 %v338, 56
        %v514 = vpop.permute.xlu0 %513
        %v516 = vsel %vm342, %v512, 0
        %v519 = vsel %vm406, %v514, 0
        %521 = vmatprep.subr.bf16.mxu0 0
        %522 = vmatpush1.bf16.msra.mxu0 0
        %523 = vmatprep.subr.bf16.mxu0 0
        %524 = vmatpush1.bf16.msra.mxu0 0
        %525 = vmatprep.subr.bf16.mxu0 0
        %526 = vmatpush1.bf16.msra.mxu0 0
        %527 = vmatprep.subr.bf16.mxu0 0
        %528 = vmatpush1.bf16.msra.mxu0 0
        %529 = vmatprep.subr.bf16.mxu0 0
        %530 = vmatpush1.bf16.msra.mxu0 0
        %531 = vmatprep.subr.bf16.mxu0 0
        %532 = vmatpush1.bf16.msra.mxu0 0
        %533 = vmatprep.subr.bf16.mxu0 0
        %534 = vmatpush1.bf16.msra.mxu0 0
        %535 = vmatprep.subr.bf16.mxu0 0
        %536 = vmatpush1.bf16.msra.mxu0 %v519
        %537 = vmatprep.subr.bf16.mxu0 0
        %538 = vmatpush2.bf16.msra.mxu0 0
        %539 = vmatprep.subr.bf16.mxu0 0
        %540 = vmatpush2.bf16.msra.mxu0 0
        %541 = vmatprep.subr.bf16.mxu0 0
        %542 = vmatpush2.bf16.msra.mxu0 0
        %543 = vmatprep.subr.bf16.mxu0 0
        %544 = vmatpush2.bf16.msra.mxu0 0
        %545 = vmatprep.subr.bf16.mxu0 0
        %546 = vmatpush2.bf16.msra.mxu0 0
        %547 = vmatprep.subr.bf16.mxu0 0
        %548 = vmatpush2.bf16.msra.mxu0 0
        %549 = vmatprep.subr.bf16.mxu0 0
        %550 = vmatpush2.bf16.msra.mxu0 0
        %551 = vmatprep.subr.bf16.mxu0 0
        %552 = vmatpush2.bf16.msra.mxu0 0
        %553 = vmatprep.mubr.bf16.mxu0 0
        %554 = vmatmul.mubr.bf16.gmra.mxu0 %v516
        %v555 = vpop.f32.mrf.mxu0
        %v556 = vadd.f32 0.0, %v555
        %v557 = vpop.f32.mrf.mxu0
        %v558 = vpop.f32.mrf.mxu0
        %v559 = vpop.f32.mrf.mxu0
        %560 = vdwg.mxu0
        %562 = vrot.lane.b32.xlu0 %v556, 8
        %v563 = vpop.permute.xlu0 %562
        %vm565 = vcmask 130112
        %566 = vst.msk [vmem:[#allocation2] sm:$0xff] %vm565, %v563
        %567 = vrot.lane.b32.xlu0 %v338, 112
        %v568 = vpop.permute.xlu0 %567
        %569 = vrot.lane.b32.xlu0 %v338, 80
        %v570 = vpop.permute.xlu0 %569
        %v572 = vsel %vm342, %v568, 0
        %v575 = vsel %vm342, %v570, 0
        %577 = vmatprep.subr.bf16.mxu0 0
        %578 = vmatpush1.bf16.xpose.msra.mxu0 0
        %579 = vmatprep.subr.bf16.mxu0 0
        %580 = vmatpush1.bf16.xpose.msra.mxu0 0
        %581 = vmatprep.subr.bf16.mxu0 0
        %582 = vmatpush1.bf16.xpose.msra.mxu0 0
        %583 = vmatprep.subr.bf16.mxu0 0
        %584 = vmatpush1.bf16.xpose.msra.mxu0 0
        %585 = vmatprep.subr.bf16.mxu0 0
        %586 = vmatpush1.bf16.xpose.msra.mxu0 0
        %587 = vmatprep.subr.bf16.mxu0 0
        %588 = vmatpush1.bf16.xpose.msra.mxu0 0
        %589 = vmatprep.subr.bf16.mxu0 0
        %590 = vmatpush1.bf16.xpose.msra.mxu0 0
        %591 = vmatprep.subr.bf16.mxu0 0
        %592 = vmatpush1.bf16.xpose.msra.mxu0 %v575
        %593 = vmatprep.subr.bf16.mxu0 0
        %594 = vmatpush2.bf16.xpose.msra.mxu0 0
        %595 = vmatprep.subr.bf16.mxu0 0
        %596 = vmatpush2.bf16.xpose.msra.mxu0 0
        %597 = vmatprep.subr.bf16.mxu0 0
        %598 = vmatpush2.bf16.xpose.msra.mxu0 0
        %599 = vmatprep.subr.bf16.mxu0 0
        %600 = vmatpush2.bf16.xpose.msra.mxu0 0
        %601 = vmatprep.subr.bf16.mxu0 0
        %602 = vmatpush2.bf16.xpose.msra.mxu0 0
        %603 = vmatprep.subr.bf16.mxu0 0
        %604 = vmatpush2.bf16.xpose.msra.mxu0 0
        %605 = vmatprep.subr.bf16.mxu0 0
        %606 = vmatpush2.bf16.xpose.msra.mxu0 0
        %607 = vmatprep.subr.bf16.mxu0 0
        %608 = vmatpush2.bf16.xpose.msra.mxu0 0
        %609 = vmatprep.mubr.bf16.mxu0 0
        %610 = vmatmul.mubr.bf16.gmra.mxu0 %v572
        %v611 = vpop.f32.mrf.mxu0
        %v612 = vadd.f32 0.0, %v611
        %v613 = vpop.f32.mrf.mxu0
        %v614 = vpop.f32.mrf.mxu0
        %v615 = vpop.f32.mrf.mxu0
        %616 = vdwg.mxu0
        %v617 = vsel %vm342, %v612, -inf
        %618 = vmax.xlane.f32.xlu0 %v617
        %v619 = vpop.xlane.xlu0 %618
        %v620 = vsub.f32 %v612, %v619
        %v621 = vmul.f32 %v620, 1.442695
        %v622 = vpow.pop %v621
        %v623 = vsel %vm342, %v622, 0.0
        %624 = vadd.xlane.f32.xlu0 %v623
        %v625 = vpop.xlane.xlu0 %624
        %v626 = vrcp.pop %v625
        %v627 = vmul.f32 %v622, %v626
        %v628 = vpack.c.bf16 %v627, %v627
        %629 = vrot.lane.b32.xlu0 %v338, 48
        %v630 = vpop.permute.xlu0 %629
        %v632 = vsel %vm342, %v628, 0
        %v635 = vsel %vm406, %v630, 0
        %637 = vmatprep.subr.bf16.mxu0 0
        %638 = vmatpush1.bf16.msra.mxu0 0
        %639 = vmatprep.subr.bf16.mxu0 0
        %640 = vmatpush1.bf16.msra.mxu0 0
        %641 = vmatprep.subr.bf16.mxu0 0
        %642 = vmatpush1.bf16.msra.mxu0 0
        %643 = vmatprep.subr.bf16.mxu0 0
        %644 = vmatpush1.bf16.msra.mxu0 0
        %645 = vmatprep.subr.bf16.mxu0 0
        %646 = vmatpush1.bf16.msra.mxu0 0
        %647 = vmatprep.subr.bf16.mxu0 0
        %648 = vmatpush1.bf16.msra.mxu0 0
        %649 = vmatprep.subr.bf16.mxu0 0
        %650 = vmatpush1.bf16.msra.mxu0 0
        %651 = vmatprep.subr.bf16.mxu0 0
        %652 = vmatpush1.bf16.msra.mxu0 %v635
        %653 = vmatprep.subr.bf16.mxu0 0
        %654 = vmatpush2.bf16.msra.mxu0 0
        %655 = vmatprep.subr.bf16.mxu0 0
        %656 = vmatpush2.bf16.msra.mxu0 0
        %657 = vmatprep.subr.bf16.mxu0 0
        %658 = vmatpush2.bf16.msra.mxu0 0
        %659 = vmatprep.subr.bf16.mxu0 0
        %660 = vmatpush2.bf16.msra.mxu0 0
        %661 = vmatprep.subr.bf16.mxu0 0
        %662 = vmatpush2.bf16.msra.mxu0 0
        %663 = vmatprep.subr.bf16.mxu0 0
        %664 = vmatpush2.bf16.msra.mxu0 0
        %665 = vmatprep.subr.bf16.mxu0 0
        %666 = vmatpush2.bf16.msra.mxu0 0
        %667 = vmatprep.subr.bf16.mxu0 0
        %668 = vmatpush2.bf16.msra.mxu0 0
        %669 = vmatprep.mubr.bf16.mxu0 0
        %670 = vmatmul.mubr.bf16.gmra.mxu0 %v632
        %v671 = vpop.f32.mrf.mxu0
        %v672 = vadd.f32 0.0, %v671
        %v673 = vpop.f32.mrf.mxu0
        %v674 = vpop.f32.mrf.mxu0
        %v675 = vpop.f32.mrf.mxu0
        %676 = vdwg.mxu0
        %678 = vrot.lane.b32.xlu0 %v672, 16
        %v679 = vpop.permute.xlu0 %678
        %vm681 = vcmask 195712
        %682 = vst.msk [vmem:[#allocation2] sm:$0xff] %vm681, %v679
        %683 = vrot.lane.b32.xlu0 %v338, 104
        %v684 = vpop.permute.xlu0 %683
        %685 = vrot.lane.b32.xlu0 %v338, 72
        %v686 = vpop.permute.xlu0 %685
        %v688 = vsel %vm342, %v684, 0
        %v691 = vsel %vm342, %v686, 0
        %693 = vmatprep.subr.bf16.mxu0 0
        %694 = vmatpush1.bf16.xpose.msra.mxu0 0
        %695 = vmatprep.subr.bf16.mxu0 0
        %696 = vmatpush1.bf16.xpose.msra.mxu0 0
        %697 = vmatprep.subr.bf16.mxu0 0
        %698 = vmatpush1.bf16.xpose.msra.mxu0 0
        %699 = vmatprep.subr.bf16.mxu0 0
        %700 = vmatpush1.bf16.xpose.msra.mxu0 0
        %701 = vmatprep.subr.bf16.mxu0 0
        %702 = vmatpush1.bf16.xpose.msra.mxu0 0
        %703 = vmatprep.subr.bf16.mxu0 0
        %704 = vmatpush1.bf16.xpose.msra.mxu0 0
        %705 = vmatprep.subr.bf16.mxu0 0
        %706 = vmatpush1.bf16.xpose.msra.mxu0 0
        %707 = vmatprep.subr.bf16.mxu0 0
        %708 = vmatpush1.bf16.xpose.msra.mxu0 %v691
        %709 = vmatprep.subr.bf16.mxu0 0
        %710 = vmatpush2.bf16.xpose.msra.mxu0 0
        %711 = vmatprep.subr.bf16.mxu0 0
        %712 = vmatpush2.bf16.xpose.msra.mxu0 0
        %713 = vmatprep.subr.bf16.mxu0 0
        %714 = vmatpush2.bf16.xpose.msra.mxu0 0
        %715 = vmatprep.subr.bf16.mxu0 0
        %716 = vmatpush2.bf16.xpose.msra.mxu0 0
        %717 = vmatprep.subr.bf16.mxu0 0
        %718 = vmatpush2.bf16.xpose.msra.mxu0 0
        %719 = vmatprep.subr.bf16.mxu0 0
        %720 = vmatpush2.bf16.xpose.msra.mxu0 0
        %721 = vmatprep.subr.bf16.mxu0 0
        %722 = vmatpush2.bf16.xpose.msra.mxu0 0
        %723 = vmatprep.subr.bf16.mxu0 0
        %724 = vmatpush2.bf16.xpose.msra.mxu0 0
        %725 = vmatprep.mubr.bf16.mxu0 0
        %726 = vmatmul.mubr.bf16.gmra.mxu0 %v688
        %v727 = vpop.f32.mrf.mxu0
        %v728 = vadd.f32 0.0, %v727
        %v729 = vpop.f32.mrf.mxu0
        %v730 = vpop.f32.mrf.mxu0
        %v731 = vpop.f32.mrf.mxu0
        %732 = vdwg.mxu0
        %v733 = vsel %vm342, %v728, -inf
        %734 = vmax.xlane.f32.xlu0 %v733
        %v735 = vpop.xlane.xlu0 %734
        %v736 = vsub.f32 %v728, %v735
        %v737 = vmul.f32 %v736, 1.442695
        %v738 = vpow.pop %v737
        %v739 = vsel %vm342, %v738, 0.0
        %740 = vadd.xlane.f32.xlu0 %v739
        %v741 = vpop.xlane.xlu0 %740
        %v742 = vrcp.pop %v741
        %v743 = vmul.f32 %v738, %v742
        %v744 = vpack.c.bf16 %v743, %v743
        %745 = vrot.lane.b32.xlu0 %v338, 40
        %v746 = vpop.permute.xlu0 %745
        %v748 = vsel %vm342, %v744, 0
        %v751 = vsel %vm406, %v746, 0
        %753 = vmatprep.subr.bf16.mxu0 0
        %754 = vmatpush1.bf16.msra.mxu0 0
        %755 = vmatprep.subr.bf16.mxu0 0
        %756 = vmatpush1.bf16.msra.mxu0 0
        %757 = vmatprep.subr.bf16.mxu0 0
        %758 = vmatpush1.bf16.msra.mxu0 0
        %759 = vmatprep.subr.bf16.mxu0 0
        %760 = vmatpush1.bf16.msra.mxu0 0
        %761 = vmatprep.subr.bf16.mxu0 0
        %762 = vmatpush1.bf16.msra.mxu0 0
        %763 = vmatprep.subr.bf16.mxu0 0
        %764 = vmatpush1.bf16.msra.mxu0 0
        %765 = vmatprep.subr.bf16.mxu0 0
        %766 = vmatpush1.bf16.msra.mxu0 0
        %767 = vmatprep.subr.bf16.mxu0 0
        %768 = vmatpush1.bf16.msra.mxu0 %v751
        %769 = vmatprep.subr.bf16.mxu0 0
        %770 = vmatpush2.bf16.msra.mxu0 0
        %771 = vmatprep.subr.bf16.mxu0 0
        %772 = vmatpush2.bf16.msra.mxu0 0
        %773 = vmatprep.subr.bf16.mxu0 0
        %774 = vmatpush2.bf16.msra.mxu0 0
        %775 = vmatprep.subr.bf16.mxu0 0
        %776 = vmatpush2.bf16.msra.mxu0 0
        %777 = vmatprep.subr.bf16.mxu0 0
        %778 = vmatpush2.bf16.msra.mxu0 0
        %779 = vmatprep.subr.bf16.mxu0 0
        %780 = vmatpush2.bf16.msra.mxu0 0
        %781 = vmatprep.subr.bf16.mxu0 0
        %782 = vmatpush2.bf16.msra.mxu0 0
        %783 = vmatprep.subr.bf16.mxu0 0
        %784 = vmatpush2.bf16.msra.mxu0 0
        %785 = vmatprep.mubr.bf16.mxu0 0
        %786 = vmatmul.mubr.bf16.gmra.mxu0 %v748
        %v787 = vpop.f32.mrf.mxu0
        %v788 = vadd.f32 0.0, %v787
        %v789 = vpop.f32.mrf.mxu0
        %v790 = vpop.f32.mrf.mxu0
        %v791 = vpop.f32.mrf.mxu0
        %792 = vdwg.mxu0
        %794 = vrot.lane.b32.xlu0 %v788, 24
        %v795 = vpop.permute.xlu0 %794
        %vm797 = vcmask 261312
        %798 = vst.msk [vmem:[#allocation2] sm:$0xff] %vm797, %v795
        %v799 = vld [vmem:[#allocation2] sm:$0xff]
        %v800 = vpack.c.bf16 %v799, %v799
        %v801 = vld [vmem:[#allocation8] sm:$0xf]
        %v802 = vld [vmem:[#allocation8 + $0x4] sm:$0xf]
        %v803 = vld [vmem:[#allocation8 + $0x8] sm:$0xf]
        %v804 = vld [vmem:[#allocation8 + $0xc] sm:$0xf]
        %v805 = vld [vmem:[%s4] sm:$0x1]
        %v807 = vlaneseq
        %v808 = vshrl.u32 %v807, 7
        %v809 = vsub.s32 0, %v808
        %v810 = vrot.slane %v805, %v809
        %v816 = vunpack.c.l.b16 %v801
        %v817 = vunpack.c.l.b16 %v802
        %v818 = vunpack.c.l.b16 %v803
        %v819 = vunpack.c.l.b16 %v804
        %v820 = vpack.c.b16 %v817, %v816
        %v821 = vpack.c.b16 %v819, %v818
        %v825 = vsel %vm294, %v800, 0
        %827 = vmatprep.subr.bf16.mxu0 0
        %828 = vmatpush1.bf16.msra.mxu0 0
        %829 = vmatprep.subr.bf16.mxu0 0
        %830 = vmatpush1.bf16.msra.mxu0 0
        %831 = vmatprep.subr.bf16.mxu0 0
        %832 = vmatpush1.bf16.msra.mxu0 0
        %833 = vmatprep.subr.bf16.mxu0 0
        %834 = vmatpush1.bf16.msra.mxu0 0
        %835 = vmatprep.subr.bf16.mxu0 0
        %836 = vmatpush1.bf16.msra.mxu0 0
        %837 = vmatprep.subr.bf16.mxu0 0
        %838 = vmatpush1.bf16.msra.mxu0 0
        %839 = vmatprep.subr.bf16.mxu0 0
        %840 = vmatpush1.bf16.msra.mxu0 %v821
        %841 = vmatprep.subr.bf16.mxu0 0
        %842 = vmatpush1.bf16.msra.mxu0 %v820
        %843 = vmatprep.subr.bf16.mxu0 0
        %844 = vmatpush2.bf16.msra.mxu0 0
        %845 = vmatprep.subr.bf16.mxu0 0
        %846 = vmatpush2.bf16.msra.mxu0 0
        %847 = vmatprep.subr.bf16.mxu0 0
        %848 = vmatpush2.bf16.msra.mxu0 0
        %849 = vmatprep.subr.bf16.mxu0 0
        %850 = vmatpush2.bf16.msra.mxu0 0
        %851 = vmatprep.subr.bf16.mxu0 0
        %852 = vmatpush2.bf16.msra.mxu0 0
        %853 = vmatprep.subr.bf16.mxu0 0
        %854 = vmatpush2.bf16.msra.mxu0 0
        %855 = vmatprep.subr.bf16.mxu0 0
        %856 = vmatpush2.bf16.msra.mxu0 0
        %857 = vmatprep.subr.bf16.mxu0 0
        %858 = vmatpush2.bf16.msra.mxu0 0
        %859 = vmatprep.mubr.bf16.mxu0 0
        %860 = vmatmul.mubr.bf16.gmra.mxu0 %v825
        %v861 = vpop.f32.mrf.mxu0
        %v862 = vadd.f32 %v810, %v861
        %v863 = vpop.f32.mrf.mxu0
        %v864 = vpop.f32.mrf.mxu0
        %v865 = vpop.f32.mrf.mxu0
        %866 = vdwg.mxu0
        %867 = vst.msk [vmem:[%s268] sm:$0xff] %vm294, %v862
        %s868 = sand.u32 %s141, 1
        %s869 = scalar_lea.sflag [#allocation5], %s868
        %s870 = sand.u32 %s141, 1
        %s871 = smul.addr %s870, 8
        %s872 = scalar_lea.vmem [#allocation9], %s871
        // Predicated region
        $region53: #{tpu_custom_call.1} parent=39 // pred_check
          %p873 = pneg %p151
        $region54: #{tpu_custom_call.1} parent=39 // pred_check_branch
          %875 = sbr.rel (%p873) target = $region56
        $region55: #{tpu_custom_call.1} parent=39 // pred_region
          %s877 = ssub.s32 128, 128
          %878 = vsyncadd %s869, %s877
          %s879 = smul.addr %s23, 128
          %s880 = scalar_lea.hbm %s5, %s879
          %s882 = sshll.u32 %s872, 4
          %s883 = int_to_ptr.vmem [resolvable:$true] %s882
          %885 = dma.vmem_to_hbm [thread:$0]  %s883, 128, %s880, %s869
        $region56: #{tpu_custom_call.1} parent=39 // pred_fallthru
          _
      $region40: #{tpu_custom_call.1} parent=5 // pred_fallthru
        _
      %p886 = scmp.le.s32.totalorder 2, %s18
      // Predicated region
      $region57: #{tpu_custom_call.1} parent=5 // pred_check
        %p887 = pneg %p886
      $region58: #{tpu_custom_call.1} parent=5 // pred_check_branch
        %889 = sbr.rel (%p887) target = $region60
      $region59: #{tpu_custom_call.1} parent=5 // pred_region
        %s890 = ssub.s32 %s18, 2
        // Predicated region
        $region61: #{tpu_custom_call.1} parent=59 // pred_check
          %p891 = pneg %p157
        $region62: #{tpu_custom_call.1} parent=59 // pred_check_branch
          %893 = sbr.rel (%p891) target = $region64
        $region63: #{tpu_custom_call.1} parent=59 // pred_region
          %s894 = sand.u32 %s142, 1
          %s895 = scalar_lea.sflag [#allocation5], %s894
          %s896 = sand.u32 %s142, 1
          %s897 = smul.addr %s896, 8
          %s898 = scalar_lea.vmem [#allocation9], %s897
          %899 = dma.done %s895, 128
        $region64: #{tpu_custom_call.1} parent=59 // pred_fallthru
          _
      $region60: #{tpu_custom_call.1} parent=5 // pred_fallthru
        _
    $region6: #{tpu_custom_call.1} parent=1 // loop_footer
      %s22 = sadd.s32 1, %s18
    $region7: #{tpu_custom_call.1} parent=1 // loop_footer_branch
      %17 = sbr.rel target = $region3
    $region8: #{tpu_custom_call.1} parent=1 // loop_exit
      _
    %900 = vsyncpa [#allocation4], 1
    %s901 = scalar_lea.sflag [#allocation4], 1
    %902 = vsyncpa %s901, 1
    %903 = vsyncpa [#allocation7], 1
    %904 = vsyncpa [#allocation5], 1
    %s905 = scalar_lea.sflag [#allocation5], 1
    %906 = vsyncpa %s905, 1

</llo_original>
